<compile_context>
chip_gen: v6e
topology: v6e:2x2x1
jax: 0.10.0
libtpu: 0.0.40
codegen_flags: <defaults>
</compile_context>

<pallas_src>
import jax
import jax.numpy as jnp
from jax.experimental import pallas as pl
from jax.experimental.pallas import tpu as pltpu

T_DIM = 768       # XLNet hidden size
I_DIM = 1000      # ResNet152 logits
I_PAD = 1024      # K-padded image feature dim (multiple of 128/256)
H_DIM = 128       # projection size
N_CLS = 3         # classes
N_PAD = 128       # lane-dense padded class dim (sliced back to 3 outside)
MAX_B_TILE = 256  # rows per grid step when B is large


def _round_up(x, m):
    return ((x + m - 1) // m) * m


def fusion_head_kernel(txt_ref, img_ref, wt_ref, wi_ref, wh_ref, b_ref, out_ref):
    b = b_ref[...]          # (2, 128) f32
    bt = b[0:1, :]          # t_linear bias
    bh = b[1:2, :]          # fused head bias = 0.5*(bft + bfi)

    # text branch: Linear(768->128) + ReLU   (bf16 MXU, f32 accumulate)
    t = jnp.dot(txt_ref[...], wt_ref[...], preferred_element_type=jnp.float32)
    t = jnp.maximum(t + bt, 0.0)

    # image branch: Linear(1024->128) + ReLU
    # (i_linear bias already folded into the ones-column / bias-row padding)
    i = jnp.dot(img_ref[...], wi_ref[...], preferred_element_type=jnp.float32)
    i = jnp.maximum(i, 0.0)

    # fused class heads + late-fusion average:
    #   0.5*(t@wft + bft + i@wfi + bfi) == concat(t,i) @ (0.5*[wft;wfi]) + bh
    ti = jnp.concatenate([t, i], axis=1).astype(jnp.bfloat16)   # (B_TILE, 256)
    out_ref[...] = jnp.dot(ti, wh_ref[...],
                           preferred_element_type=jnp.float32) + bh


def fusion_head(txt_feat, img_feat, kp):
    B = txt_feat.shape[0]
    b_pad = _round_up(B, 8)
    b_tile = min(MAX_B_TILE, b_pad)
    b_pad = _round_up(b_pad, b_tile)
    nb = b_pad // b_tile

    # pad image K 1000 -> 1024: ones column carries the i_linear bias,
    # the rest is zeros.
    img_p = jnp.concatenate(
        [img_feat,
         jnp.ones((B, 1), jnp.float32),
         jnp.zeros((B, I_PAD - I_DIM - 1), jnp.float32)], axis=1)

    # pad batch to a multiple of the tile; feed the MXU bf16 activations.
    txt_p = jnp.pad(txt_feat, ((0, b_pad - B), (0, 0))).astype(jnp.bfloat16)
    img_p = jnp.pad(img_p, ((0, b_pad - B), (0, 0))).astype(jnp.bfloat16)

    out = pl.pallas_call(
        fusion_head_kernel,
        out_shape=jax.ShapeDtypeStruct((b_pad, N_PAD), jnp.float32),
        grid=(nb,),
        in_specs=[
            pl.BlockSpec((b_tile, T_DIM), lambda b: (b, 0)),        # txt tile
            pl.BlockSpec((b_tile, I_PAD), lambda b: (b, 0)),        # img tile
            pl.BlockSpec((T_DIM, H_DIM), lambda b: (0, 0)),         # wt (resident)
            pl.BlockSpec((I_PAD, H_DIM), lambda b: (0, 0)),         # wi (resident)
            pl.BlockSpec((2 * H_DIM, N_PAD), lambda b: (0, 0)),     # fused head W
            pl.BlockSpec((2, N_PAD), lambda b: (0, 0)),             # biases
        ],
        out_specs=pl.BlockSpec((b_tile, N_PAD), lambda b: (b, 0)),
        compiler_params=pltpu.CompilerParams(
            dimension_semantics=("parallel",)),
    )(txt_p, img_p, kp["wt"], kp["wi"], kp["wh"], kp["b"])
    return out[:B, :N_CLS]


# ----------------------------------------------------------------------------
# Deterministic parameter init (head only; shapes from the module __init__).
# ----------------------------------------------------------------------------
def init_params(key):
    ks = jax.random.split(key, 8)
    scale = 0.02
    raw = dict(
        wt=scale * jax.random.normal(ks[0], (T_DIM, H_DIM), jnp.float32),
        bt=scale * jax.random.normal(ks[1], (1, H_DIM), jnp.float32),
        wi=scale * jax.random.normal(ks[2], (I_DIM, H_DIM), jnp.float32),
        bi=scale * jax.random.normal(ks[3], (1, H_DIM), jnp.float32),
        wft=scale * jax.random.normal(ks[4], (H_DIM, N_CLS), jnp.float32),
        bft=scale * jax.random.normal(ks[5], (1, N_CLS), jnp.float32),
        wfi=scale * jax.random.normal(ks[6], (H_DIM, N_CLS), jnp.float32),
        bfi=scale * jax.random.normal(ks[7], (1, N_CLS), jnp.float32),
    )

    # --- pack kernel params ---------------------------------------------
    # wi padded to K=1024 with bi folded into row 1000 (paired with the ones
    # column appended to the image features).
    wi_pad = jnp.concatenate(
        [raw["wi"], raw["bi"],
         jnp.zeros((I_PAD - I_DIM - 1, H_DIM), jnp.float32)], axis=0)

    # fused head: 0.5 * [wft; wfi], lane-dense padded to 128 output cols.
    wh = 0.5 * jnp.concatenate([raw["wft"], raw["wfi"]], axis=0)   # (256, 3)
    wh = jnp.pad(wh, ((0, 0), (0, N_PAD - N_CLS)))                 # (256, 128)
    bh = 0.5 * (raw["bft"] + raw["bfi"])                           # (1, 3)
    bh = jnp.pad(bh, ((0, 0), (0, N_PAD - N_CLS)))                 # (1, 128)

    kernel = dict(
        wt=raw["wt"].astype(jnp.bfloat16),
        wi=wi_pad.astype(jnp.bfloat16),
        wh=wh.astype(jnp.bfloat16),
        b=jnp.concatenate([raw["bt"], bh], axis=0).astype(jnp.float32),  # (2,128)
    )
    return {"raw": raw, "kernel": kernel}


# ----------------------------------------------------------------------------
# Backbone stubs (plain JAX glue): produce correctly shaped features.
# ----------------------------------------------------------------------------
def txt_backbone_stub(input_ids, attention_mask, key):
    # TODO(synk): stands in for XLNetModel(...).last_hidden_state[:, 0, :]
    vocab = 64
    emb = 0.02 * jax.random.normal(key, (vocab, T_DIM), jnp.float32)
    tok = emb[input_ids % vocab]                                  # (B, S, 768)
    mask = attention_mask.astype(jnp.float32)[..., None]          # (B, S, 1)
    return (tok * mask).sum(axis=1) / jnp.maximum(mask.sum(axis=1), 1.0)


def img_backbone_stub(image, key):
    # TODO(synk): stands in for torchvision resnet152 logits (B, 1000)
    B = image.shape[0]
    flat = image.reshape(B, -1)                                   # NCHW flattened
    proj = 0.02 * jax.random.normal(key, (flat.shape[1], I_DIM), jnp.float32)
    return flat @ proj


# ----------------------------------------------------------------------------
# Pure-JAX reference, emulating the kernel's bf16-in / f32-accumulate math.
# ----------------------------------------------------------------------------
def reference_head(txt_feat, img_feat, raw):
    f32 = jnp.float32
    tb = txt_feat.astype(jnp.bfloat16)
    ib = img_feat.astype(jnp.bfloat16)
    wt = raw["wt"].astype(jnp.bfloat16)
    wi = raw["wi"].astype(jnp.bfloat16)
    bi = raw["bi"].astype(jnp.bfloat16).astype(f32)   # bi travels through bf16 in kernel

    t = jnp.maximum(jnp.dot(tb, wt, preferred_element_type=f32) + raw["bt"], 0.0)
    i = jnp.maximum(jnp.dot(ib, wi, preferred_element_type=f32) + bi, 0.0)

    t16 = t.astype(jnp.bfloat16)
    i16 = i.astype(jnp.bfloat16)
    wft = (0.5 * raw["wft"]).astype(jnp.bfloat16)
    wfi = (0.5 * raw["wfi"]).astype(jnp.bfloat16)
    return (jnp.dot(t16, wft, preferred_element_type=f32)
            + jnp.dot(i16, wfi, preferred_element_type=f32)
            + 0.5 * (raw["bft"] + raw["bfi"]))


if __name__ == "__main__":
    key = jax.random.PRNGKey(0)
    k_param, k_txt, k_img, k_ids, k_image = jax.random.split(key, 5)

    B, S = 2, 8
    input_ids = jax.random.randint(k_ids, (B, S), 0, 64, dtype=jnp.int32)
    attention_mask = jnp.ones((B, S), dtype=jnp.int32)
    image = jax.random.normal(k_image, (B, 3, 16, 16), jnp.float32)  # NCHW

    params = init_params(k_param)
    txt_feat = txt_backbone_stub(input_ids, attention_mask, k_txt)   # (B, 768)
    img_feat = img_backbone_stub(image, k_img)                       # (B, 1000)

    out = fusion_head(txt_feat, img_feat, params["kernel"])
    out = jax.block_until_ready(out)

    ref = reference_head(txt_feat, img_feat, params["raw"])
    assert out.shape == (B, N_CLS)
    assert jnp.allclose(out, ref, atol=1e-4, rtol=1e-3), "mismatch vs reference"

    print("KERNEL_OK")
</pallas_src>

<mosaic_0001>
module attributes {stable_mosaic.version = 11 : i64} {
  func.func @fusion_head_kernel(%arg0: i32, %arg1: memref<8x768xbf16, #tpu.memory_space<vmem>>, %arg2: memref<8x1024xbf16, #tpu.memory_space<vmem>>, %arg3: memref<768x128xbf16, #tpu.memory_space<vmem>>, %arg4: memref<1024x128xbf16, #tpu.memory_space<vmem>>, %arg5: memref<256x128xbf16, #tpu.memory_space<vmem>>, %arg6: memref<2x128xf32, #tpu.memory_space<vmem>>, %arg7: memref<8x128xf32, #tpu.memory_space<vmem>>) attributes {dimension_semantics = [#tpu.dimension_semantics<parallel>], iteration_bounds = array<i64: 1>, scalar_prefetch = 0 : i64, scratch_operands = 0 : i64, tpu.core_type = #tpu.core_type<tc>, window_params = [{transform_indices = @transform_0, window_bounds = array<i64: 8, 768>}, {transform_indices = @transform_1, window_bounds = array<i64: 8, 1024>}, {pipeline_mode = #tpu.pipeline_mode<synchronous>, transform_indices = @transform_2, window_bounds = array<i64: 768, 128>}, {pipeline_mode = #tpu.pipeline_mode<synchronous>, transform_indices = @transform_3, window_bounds = array<i64: 1024, 128>}, {pipeline_mode = #tpu.pipeline_mode<synchronous>, transform_indices = @transform_4, window_bounds = array<i64: 256, 128>}, {pipeline_mode = #tpu.pipeline_mode<synchronous>, transform_indices = @transform_5, window_bounds = array<i64: 2, 128>}, {transform_indices = @transform_6, window_bounds = array<i64: 8, 128>}]} {
    %c0 = arith.constant 0 : index
    %c0_0 = arith.constant 0 : index
    %0 = vector.load %arg6[%c0, %c0_0] : memref<2x128xf32, #tpu.memory_space<vmem>>, vector<2x128xf32>
    %1 = vector.extract_strided_slice %0 {offsets = [0, 0], sizes = [1, 128], strides = [1, 1]} : vector<2x128xf32> to vector<1x128xf32>
    %2 = vector.extract_strided_slice %0 {offsets = [1, 0], sizes = [1, 128], strides = [1, 1]} : vector<2x128xf32> to vector<1x128xf32>
    %c0_1 = arith.constant 0 : index
    %c0_2 = arith.constant 0 : index
    %3 = vector.load %arg1[%c0_1, %c0_2] : memref<8x768xbf16, #tpu.memory_space<vmem>>, vector<8x768xbf16>
    %c0_3 = arith.constant 0 : index
    %c0_4 = arith.constant 0 : index
    %4 = vector.load %arg3[%c0_3, %c0_4] : memref<768x128xbf16, #tpu.memory_space<vmem>>, vector<768x128xbf16>
    %cst = arith.constant dense<0.000000e+00> : vector<8x128xf32>
    %5 = tpu.matmul %3, %4, %cst {dimension_numbers = #tpu.dot_dimension_numbers<[1], [0], [0], [1], [0, 0, 1, 1], [], []>} : vector<8x768xbf16>, vector<768x128xbf16>, vector<8x128xf32> -> vector<8x128xf32>
    %6 = vector.broadcast %1 : vector<1x128xf32> to vector<8x128xf32>
    %7 = arith.addf %5, %6 : vector<8x128xf32>
    %cst_5 = arith.constant 0.000000e+00 : f32
    %8 = vector.broadcast %cst_5 : f32 to vector<8x128xf32>
    %9 = arith.maximumf %7, %8 : vector<8x128xf32>
    %c0_6 = arith.constant 0 : index
    %c0_7 = arith.constant 0 : index
    %10 = vector.load %arg2[%c0_6, %c0_7] : memref<8x1024xbf16, #tpu.memory_space<vmem>>, vector<8x1024xbf16>
    %c0_8 = arith.constant 0 : index
    %c0_9 = arith.constant 0 : index
    %11 = vector.load %arg4[%c0_8, %c0_9] : memref<1024x128xbf16, #tpu.memory_space<vmem>>, vector<1024x128xbf16>
    %cst_10 = arith.constant dense<0.000000e+00> : vector<8x128xf32>
    %12 = tpu.matmul %10, %11, %cst_10 {dimension_numbers = #tpu.dot_dimension_numbers<[1], [0], [0], [1], [0, 0, 1, 1], [], []>} : vector<8x1024xbf16>, vector<1024x128xbf16>, vector<8x128xf32> -> vector<8x128xf32>
    %cst_11 = arith.constant 0.000000e+00 : f32
    %13 = vector.broadcast %cst_11 : f32 to vector<8x128xf32>
    %14 = arith.maximumf %12, %13 : vector<8x128xf32>
    %15 = tpu.concatenate %9, %14 in 1 : vector<8x128xf32>, vector<8x128xf32> -> vector<8x256xf32>
    %16 = arith.truncf %15 : vector<8x256xf32> to vector<8x256xbf16>
    %c0_12 = arith.constant 0 : index
    %c0_13 = arith.constant 0 : index
    %17 = vector.load %arg5[%c0_12, %c0_13] : memref<256x128xbf16, #tpu.memory_space<vmem>>, vector<256x128xbf16>
    %cst_14 = arith.constant dense<0.000000e+00> : vector<8x128xf32>
    %18 = tpu.matmul %16, %17, %cst_14 {dimension_numbers = #tpu.dot_dimension_numbers<[1], [0], [0], [1], [0, 0, 1, 1], [], []>} : vector<8x256xbf16>, vector<256x128xbf16>, vector<8x128xf32> -> vector<8x128xf32>
    %19 = vector.broadcast %2 : vector<1x128xf32> to vector<8x128xf32>
    %20 = arith.addf %18, %19 : vector<8x128xf32>
    %c0_15 = arith.constant 0 : index
    %c0_16 = arith.constant 0 : index
    %21 = vector.load %arg7[%c0_15, %c0_16] : memref<8x128xf32, #tpu.memory_space<vmem>>, vector<8x128xf32>
    tpu.vector_store %arg7[%c0_15, %c0_16], %20 {strides = array<i32>} : memref<8x128xf32, #tpu.memory_space<vmem>>, vector<8x128xf32>,
    return
  }
  func.func @transform_0(%arg0: i32) -> (i32, i32) {
    %c0_i32 = arith.constant 0 : i32
    %c0_i32_0 = arith.constant 0 : i32
    return %arg0, %c0_i32 : i32, i32
  }
  func.func @transform_1(%arg0: i32) -> (i32, i32) {
    %c0_i32 = arith.constant 0 : i32
    %c0_i32_0 = arith.constant 0 : i32
    return %arg0, %c0_i32 : i32, i32
  }
  func.func @transform_2(%arg0: i32) -> (i32, i32) {
    %c0_i32 = arith.constant 0 : i32
    %c0_i32_0 = arith.constant 0 : i32
    %c0_i32_1 = arith.constant 0 : i32
    return %c0_i32, %c0_i32_0 : i32, i32
  }
  func.func @transform_3(%arg0: i32) -> (i32, i32) {
    %c0_i32 = arith.constant 0 : i32
    %c0_i32_0 = arith.constant 0 : i32
    %c0_i32_1 = arith.constant 0 : i32
    return %c0_i32, %c0_i32_0 : i32, i32
  }
  func.func @transform_4(%arg0: i32) -> (i32, i32) {
    %c0_i32 = arith.constant 0 : i32
    %c0_i32_0 = arith.constant 0 : i32
    %c0_i32_1 = arith.constant 0 : i32
    return %c0_i32, %c0_i32_0 : i32, i32
  }
  func.func @transform_5(%arg0: i32) -> (i32, i32) {
    %c0_i32 = arith.constant 0 : i32
    %c0_i32_0 = arith.constant 0 : i32
    %c0_i32_1 = arith.constant 0 : i32
    return %c0_i32, %c0_i32_0 : i32, i32
  }
  func.func @transform_6(%arg0: i32) -> (i32, i32) {
    %c0_i32 = arith.constant 0 : i32
    %c0_i32_0 = arith.constant 0 : i32
    return %arg0, %c0_i32 : i32, i32
  }
}

</mosaic_0001>

<llo_original>
// kernel: tpu_custom_call.1
$region0: #{tpu_custom_call.1}
  #allocation0 [shape = 'u32[]', space=smem, size = 0x4, offset = 0x4, fixed_abs, tag = 'smem constant byte address 0x4 - core index']
  #allocation1 [shape = 'u32[144,128]{1,0:T(1,128)}', space=vmem, size = 0x12000, scoped, tag = 'internal scratch']
  %s0 = inlined_call_operand.hbm [shape: bf16[8,768], index: 0, kind: input, shape index: {}]
  %s1 = inlined_call_operand.hbm [shape: bf16[8,1024], index: 1, kind: input, shape index: {}]
  %s2 = inlined_call_operand.hbm [shape: bf16[768,128], index: 2, kind: input, shape index: {}]
  %s3 = inlined_call_operand.hbm [shape: bf16[1024,128], index: 3, kind: input, shape index: {}]
  %s4 = inlined_call_operand.hbm [shape: bf16[256,128], index: 4, kind: input, shape index: {}]
  %s5 = inlined_call_operand.vmem [shape: f32[2,128], index: 5, kind: input, shape index: {}]
  %s6 = inlined_call_operand.hbm [shape: f32[8,128], index: 6, kind: output, shape index: {}]
  %s7 = sld [smem:[#allocation0]]
  $region54: #{tpu_custom_call.1} parent=0
    _
  %s9 = ssub.s32 1, %s7
  %s10 = scalar_select 0, %s9, %s7
  $region1: #{tpu_custom_call.1} parent=0
    #allocation2 [shape = 'u8[12288]{0}', space=vmem, size = 0x3000, scoped, tag = 'input window, operand 0, single buffered']
    #allocation3 [shape = 's32[1]{0}', space=sflag, size = 0x4, scoped, tag = 'scoped memory for tpu_custom_call.1']
    #allocation4 [shape = 's32[1]{0}', space=sflag, size = 0x4, scoped, tag = 'scoped memory for tpu_custom_call.1']
    #allocation5 [shape = 'u8[16384]{0}', space=vmem, size = 0x4000, scoped, tag = 'input window, operand 1, single buffered']
    #allocation6 [shape = 's32[1]{0}', space=sflag, size = 0x4, scoped, tag = 'scoped memory for tpu_custom_call.1']
    #allocation7 [shape = 'u8[196608]{0}', space=vmem, size = 0x30000, scoped, tag = 'input window, operand 2, single buffered']
    #allocation8 [shape = 'u8[262144]{0}', space=vmem, size = 0x40000, scoped, tag = 'input window, operand 3, single buffered']
    #allocation9 [shape = 's32[1]{0}', space=sflag, size = 0x4, scoped, tag = 'scoped memory for tpu_custom_call.1']
    #allocation10 [shape = 'u8[65536]{0}', space=vmem, size = 0x10000, scoped, tag = 'input window, operand 4, single buffered']
    #allocation11 [shape = 'u8[4096]{0}', space=vmem, size = 0x1000, scoped, tag = 'output window, operand 0, single buffered']
    %11 = vsyncpa [#allocation3], 0
    %12 = vsyncpa [#allocation6], 0
    %13 = vsyncpa [#allocation9], 0
    %14 = vsyncpa [#allocation4], 0
    // Predicated region
    $region2: #{tpu_custom_call.1} parent=1 // pred_check
      _
    $region3: #{tpu_custom_call.1} parent=1 // pred_check_branch
      %16 = sbr.rel (0) target = $region5
    $region4: #{tpu_custom_call.1} parent=1 // pred_region
      %s18 = ssub.s32 384, 384
      %19 = vsyncadd [#allocation3], %s18
      %s21 = sshll.u32 [#allocation2], 4
      %s22 = int_to_ptr.vmem [resolvable:$true] %s21
      %24 = dma.hbm_to_vmem [thread:$0]  %s0, 384, %s22, [#allocation3]
    $region5: #{tpu_custom_call.1} parent=1 // pred_fallthru
      _
    // Predicated region
    $region6: #{tpu_custom_call.1} parent=1 // pred_check
      _
    $region7: #{tpu_custom_call.1} parent=1 // pred_check_branch
      %26 = sbr.rel (0) target = $region9
    $region8: #{tpu_custom_call.1} parent=1 // pred_region
      %s28 = ssub.s32 512, 512
      %29 = vsyncadd [#allocation6], %s28
      %s31 = sshll.u32 [#allocation5], 4
      %s32 = int_to_ptr.vmem [resolvable:$true] %s31
      %34 = dma.hbm_to_vmem [thread:$0]  %s1, 512, %s32, [#allocation6]
    $region9: #{tpu_custom_call.1} parent=1 // pred_fallthru
      _
    // Predicated region
    $region10: #{tpu_custom_call.1} parent=1 // pred_check
      _
    $region11: #{tpu_custom_call.1} parent=1 // pred_check_branch
      %36 = sbr.rel (0) target = $region13
    $region12: #{tpu_custom_call.1} parent=1 // pred_region
      %s38 = ssub.s32 6144, 6144
      %39 = vsyncadd [#allocation6], %s38
      %s40 = sshll.u32 [#allocation7], 4
      %s41 = int_to_ptr.vmem [resolvable:$true] %s40
      %46 = dma.hbm_to_vmem [thread:$0]  %s2, 6144, %s41, [#allocation6], 64, 64, 4
    $region13: #{tpu_custom_call.1} parent=1 // pred_fallthru
      _
    // Predicated region
    $region14: #{tpu_custom_call.1} parent=1 // pred_check
      _
    $region15: #{tpu_custom_call.1} parent=1 // pred_check_branch
      %48 = sbr.rel (0) target = $region17
    $region16: #{tpu_custom_call.1} parent=1 // pred_region
      %s50 = ssub.s32 8192, 8192
      %51 = vsyncadd [#allocation9], %s50
      %s52 = sshll.u32 [#allocation8], 4
      %s53 = int_to_ptr.vmem [resolvable:$true] %s52
      %58 = dma.hbm_to_vmem [thread:$0]  %s3, 8192, %s53, [#allocation9], 64, 64, 4
    $region17: #{tpu_custom_call.1} parent=1 // pred_fallthru
      _
    // Predicated region
    $region18: #{tpu_custom_call.1} parent=1 // pred_check
      _
    $region19: #{tpu_custom_call.1} parent=1 // pred_check_branch
      %60 = sbr.rel (0) target = $region21
    $region20: #{tpu_custom_call.1} parent=1 // pred_region
      %s62 = ssub.s32 2048, 2048
      %63 = vsyncadd [#allocation9], %s62
      %s64 = sshll.u32 [#allocation10], 4
      %s65 = int_to_ptr.vmem [resolvable:$true] %s64
      %70 = dma.hbm_to_vmem [thread:$0]  %s4, 2048, %s65, [#allocation9], 64, 64, 4
    $region21: #{tpu_custom_call.1} parent=1 // pred_fallthru
      _
    // Predicated region
    $region22: #{tpu_custom_call.1} parent=1 // pred_check
      _
    $region23: #{tpu_custom_call.1} parent=1 // pred_check_branch
      %72 = sbr.rel (0) target = $region25
    $region24: #{tpu_custom_call.1} parent=1 // pred_region
      _
    $region25: #{tpu_custom_call.1} parent=1 // pred_fallthru
      _
    // Predicated region
    $region26: #{tpu_custom_call.1} parent=1 // pred_check
      _
    $region27: #{tpu_custom_call.1} parent=1 // pred_check_branch
      %74 = sbr.rel (0) target = $region29
    $region28: #{tpu_custom_call.1} parent=1 // pred_region
      %75 = dma.done [#allocation3], 384
    $region29: #{tpu_custom_call.1} parent=1 // pred_fallthru
      _
    // Predicated region
    $region30: #{tpu_custom_call.1} parent=1 // pred_check
      _
    $region31: #{tpu_custom_call.1} parent=1 // pred_check_branch
      %77 = sbr.rel (0) target = $region33
    $region32: #{tpu_custom_call.1} parent=1 // pred_region
      %78 = dma.done [#allocation6], 512
    $region33: #{tpu_custom_call.1} parent=1 // pred_fallthru
      _
    // Predicated region
    $region34: #{tpu_custom_call.1} parent=1 // pred_check
      _
    $region35: #{tpu_custom_call.1} parent=1 // pred_check_branch
      %80 = sbr.rel (0) target = $region37
    $region36: #{tpu_custom_call.1} parent=1 // pred_region
      %81 = dma.done [#allocation6], 6144
    $region37: #{tpu_custom_call.1} parent=1 // pred_fallthru
      _
    // Predicated region
    $region38: #{tpu_custom_call.1} parent=1 // pred_check
      _
    $region39: #{tpu_custom_call.1} parent=1 // pred_check_branch
      %83 = sbr.rel (0) target = $region41
    $region40: #{tpu_custom_call.1} parent=1 // pred_region
      %84 = dma.done [#allocation9], 8192
    $region41: #{tpu_custom_call.1} parent=1 // pred_fallthru
      _
    // Predicated region
    $region42: #{tpu_custom_call.1} parent=1 // pred_check
      _
    $region43: #{tpu_custom_call.1} parent=1 // pred_check_branch
      %86 = sbr.rel (0) target = $region45
    $region44: #{tpu_custom_call.1} parent=1 // pred_region
      %87 = dma.done [#allocation9], 2048
    $region45: #{tpu_custom_call.1} parent=1 // pred_fallthru
      _
    %v89 = vld [vmem:[%s5] sm:$0x3]
    %v90 = vld [vmem:[#allocation2] sm:$0xff]
    %v91 = vld [vmem:[#allocation2 + $0x8] sm:$0xff]
    %v92 = vld [vmem:[#allocation2 + $0x10] sm:$0xff]
    %v93 = vld [vmem:[#allocation7] sm:$0xf]
    %v94 = vld [vmem:[#allocation7 + $0x4] sm:$0xf]
    %v95 = vld [vmem:[#allocation7 + $0x8] sm:$0xf]
    %v96 = vld [vmem:[#allocation7 + $0xc] sm:$0xf]
    %v97 = vld [vmem:[#allocation7 + $0x10] sm:$0xf]
    %v98 = vld [vmem:[#allocation7 + $0x14] sm:$0xf]
    %v99 = vld [vmem:[#allocation7 + $0x18] sm:$0xf]
    %v100 = vld [vmem:[#allocation7 + $0x1c] sm:$0xf]
    %v101 = vld [vmem:[#allocation7 + $0x20] sm:$0xf]
    %v102 = vld [vmem:[#allocation7 + $0x24] sm:$0xf]
    %v103 = vld [vmem:[#allocation7 + $0x28] sm:$0xf]
    %v104 = vld [vmem:[#allocation7 + $0x2c] sm:$0xf]
    %v105 = vld [vmem:[#allocation7 + $0x30] sm:$0xf]
    %v106 = vld [vmem:[#allocation7 + $0x34] sm:$0xf]
    %v107 = vld [vmem:[#allocation7 + $0x38] sm:$0xf]
    %v108 = vld [vmem:[#allocation7 + $0x3c] sm:$0xf]
    %v109 = vld [vmem:[#allocation7 + $0x40] sm:$0xf]
    %v110 = vld [vmem:[#allocation7 + $0x44] sm:$0xf]
    %v111 = vld [vmem:[#allocation7 + $0x48] sm:$0xf]
    %v112 = vld [vmem:[#allocation7 + $0x4c] sm:$0xf]
    %v113 = vld [vmem:[#allocation7 + $0x50] sm:$0xf]
    %v114 = vld [vmem:[#allocation7 + $0x54] sm:$0xf]
    %v115 = vld [vmem:[#allocation7 + $0x58] sm:$0xf]
    %v116 = vld [vmem:[#allocation7 + $0x5c] sm:$0xf]
    %v117 = vld [vmem:[#allocation7 + $0x60] sm:$0xf]
    %v118 = vld [vmem:[#allocation7 + $0x64] sm:$0xf]
    %v119 = vld [vmem:[#allocation7 + $0x68] sm:$0xf]
    %v120 = vld [vmem:[#allocation7 + $0x6c] sm:$0xf]
    %v121 = vld [vmem:[#allocation7 + $0x70] sm:$0xf]
    %v122 = vld [vmem:[#allocation7 + $0x74] sm:$0xf]
    %v123 = vld [vmem:[#allocation7 + $0x78] sm:$0xf]
    %v124 = vld [vmem:[#allocation7 + $0x7c] sm:$0xf]
    %v125 = vld [vmem:[#allocation7 + $0x80] sm:$0xf]
    %v126 = vld [vmem:[#allocation7 + $0x84] sm:$0xf]
    %v127 = vld [vmem:[#allocation7 + $0x88] sm:$0xf]
    %v128 = vld [vmem:[#allocation7 + $0x8c] sm:$0xf]
    %v129 = vld [vmem:[#allocation7 + $0x90] sm:$0xf]
    %v130 = vld [vmem:[#allocation7 + $0x94] sm:$0xf]
    %v131 = vld [vmem:[#allocation7 + $0x98] sm:$0xf]
    %v132 = vld [vmem:[#allocation7 + $0x9c] sm:$0xf]
    %v133 = vld [vmem:[#allocation7 + $0xa0] sm:$0xf]
    %v134 = vld [vmem:[#allocation7 + $0xa4] sm:$0xf]
    %v135 = vld [vmem:[#allocation7 + $0xa8] sm:$0xf]
    %v136 = vld [vmem:[#allocation7 + $0xac] sm:$0xf]
    %v137 = vld [vmem:[#allocation7 + $0xb0] sm:$0xf]
    %v138 = vld [vmem:[#allocation7 + $0xb4] sm:$0xf]
    %v139 = vld [vmem:[#allocation7 + $0xb8] sm:$0xf]
    %v140 = vld [vmem:[#allocation7 + $0xbc] sm:$0xf]
    %v141 = vld [vmem:[#allocation7 + $0xc0] sm:$0xf]
    %v142 = vld [vmem:[#allocation7 + $0xc4] sm:$0xf]
    %v143 = vld [vmem:[#allocation7 + $0xc8] sm:$0xf]
    %v144 = vld [vmem:[#allocation7 + $0xcc] sm:$0xf]
    %v145 = vld [vmem:[#allocation7 + $0xd0] sm:$0xf]
    %v146 = vld [vmem:[#allocation7 + $0xd4] sm:$0xf]
    %v147 = vld [vmem:[#allocation7 + $0xd8] sm:$0xf]
    %v148 = vld [vmem:[#allocation7 + $0xdc] sm:$0xf]
    %v149 = vld [vmem:[#allocation7 + $0xe0] sm:$0xf]
    %v150 = vld [vmem:[#allocation7 + $0xe4] sm:$0xf]
    %v151 = vld [vmem:[#allocation7 + $0xe8] sm:$0xf]
    %v152 = vld [vmem:[#allocation7 + $0xec] sm:$0xf]
    %v153 = vld [vmem:[#allocation7 + $0xf0] sm:$0xf]
    %v154 = vld [vmem:[#allocation7 + $0xf4] sm:$0xf]
    %v155 = vld [vmem:[#allocation7 + $0xf8] sm:$0xf]
    %v156 = vld [vmem:[#allocation7 + $0xfc] sm:$0xf]
    %v157 = vld [vmem:[#allocation7 + $0x100] sm:$0xf]
    %v158 = vld [vmem:[#allocation7 + $0x104] sm:$0xf]
    %v159 = vld [vmem:[#allocation7 + $0x108] sm:$0xf]
    %v160 = vld [vmem:[#allocation7 + $0x10c] sm:$0xf]
    %v161 = vld [vmem:[#allocation7 + $0x110] sm:$0xf]
    %v162 = vld [vmem:[#allocation7 + $0x114] sm:$0xf]
    %v163 = vld [vmem:[#allocation7 + $0x118] sm:$0xf]
    %v164 = vld [vmem:[#allocation7 + $0x11c] sm:$0xf]
    %v165 = vld [vmem:[#allocation7 + $0x120] sm:$0xf]
    %v166 = vld [vmem:[#allocation7 + $0x124] sm:$0xf]
    %v167 = vld [vmem:[#allocation7 + $0x128] sm:$0xf]
    %v168 = vld [vmem:[#allocation7 + $0x12c] sm:$0xf]
    %v169 = vld [vmem:[#allocation7 + $0x130] sm:$0xf]
    %v170 = vld [vmem:[#allocation7 + $0x134] sm:$0xf]
    %v171 = vld [vmem:[#allocation7 + $0x138] sm:$0xf]
    %v172 = vld [vmem:[#allocation7 + $0x13c] sm:$0xf]
    %v173 = vld [vmem:[#allocation7 + $0x140] sm:$0xf]
    %v174 = vld [vmem:[#allocation7 + $0x144] sm:$0xf]
    %v175 = vld [vmem:[#allocation7 + $0x148] sm:$0xf]
    %v176 = vld [vmem:[#allocation7 + $0x14c] sm:$0xf]
    %v177 = vld [vmem:[#allocation7 + $0x150] sm:$0xf]
    %v178 = vld [vmem:[#allocation7 + $0x154] sm:$0xf]
    %v179 = vld [vmem:[#allocation7 + $0x158] sm:$0xf]
    %v180 = vld [vmem:[#allocation7 + $0x15c] sm:$0xf]
    %v181 = vld [vmem:[#allocation7 + $0x160] sm:$0xf]
    %v182 = vld [vmem:[#allocation7 + $0x164] sm:$0xf]
    %v183 = vld [vmem:[#allocation7 + $0x168] sm:$0xf]
    %v184 = vld [vmem:[#allocation7 + $0x16c] sm:$0xf]
    %v185 = vld [vmem:[#allocation7 + $0x170] sm:$0xf]
    %v186 = vld [vmem:[#allocation7 + $0x174] sm:$0xf]
    %v187 = vld [vmem:[#allocation7 + $0x178] sm:$0xf]
    %v188 = vld [vmem:[#allocation7 + $0x17c] sm:$0xf]
    %v189 = vlaneseq
    %v190 = vshrl.u32 %v189, 7
    %v191 = vsub.s32 0, %v190
    %v192 = vrot.slane %v89, %v191
    %v196 = vunpack.c.l.b16 %v90
    %v197 = vunpack.c.h.b16 %v90
    %v198 = vunpack.c.l.b16 %v91
    %v199 = vunpack.c.h.b16 %v91
    %v200 = vunpack.c.l.b16 %v92
    %v201 = vunpack.c.h.b16 %v92
    %v202 = vpack.c.b16 %v196, %v196
    %v203 = vpack.c.b16 %v197, %v197
    %v204 = vpack.c.b16 %v198, %v198
    %v205 = vpack.c.b16 %v199, %v199
    %v206 = vpack.c.b16 %v200, %v200
    %v207 = vpack.c.b16 %v201, %v201
    %v310 = vunpack.c.l.b16 %v93
    %v311 = vunpack.c.l.b16 %v94
    %v312 = vunpack.c.l.b16 %v95
    %v313 = vunpack.c.l.b16 %v96
    %v314 = vunpack.c.l.b16 %v97
    %v315 = vunpack.c.l.b16 %v98
    %v316 = vunpack.c.l.b16 %v99
    %v317 = vunpack.c.l.b16 %v100
    %v318 = vunpack.c.l.b16 %v101
    %v319 = vunpack.c.l.b16 %v102
    %v320 = vunpack.c.l.b16 %v103
    %v321 = vunpack.c.l.b16 %v104
    %v322 = vunpack.c.l.b16 %v105
    %v323 = vunpack.c.l.b16 %v106
    %v324 = vunpack.c.l.b16 %v107
    %v325 = vunpack.c.l.b16 %v108
    %v326 = vunpack.c.l.b16 %v109
    %v327 = vunpack.c.l.b16 %v110
    %v328 = vunpack.c.l.b16 %v111
    %v329 = vunpack.c.l.b16 %v112
    %v330 = vunpack.c.l.b16 %v113
    %v331 = vunpack.c.l.b16 %v114
    %v332 = vunpack.c.l.b16 %v115
    %v333 = vunpack.c.l.b16 %v116
    %v334 = vunpack.c.l.b16 %v117
    %v335 = vunpack.c.l.b16 %v118
    %v336 = vunpack.c.l.b16 %v119
    %v337 = vunpack.c.l.b16 %v120
    %v338 = vunpack.c.l.b16 %v121
    %v339 = vunpack.c.l.b16 %v122
    %v340 = vunpack.c.l.b16 %v123
    %v341 = vunpack.c.l.b16 %v124
    %v342 = vunpack.c.l.b16 %v125
    %v343 = vunpack.c.l.b16 %v126
    %v344 = vunpack.c.l.b16 %v127
    %v345 = vunpack.c.l.b16 %v128
    %v346 = vunpack.c.l.b16 %v129
    %v347 = vunpack.c.l.b16 %v130
    %v348 = vunpack.c.l.b16 %v131
    %v349 = vunpack.c.l.b16 %v132
    %v350 = vunpack.c.l.b16 %v133
    %v351 = vunpack.c.l.b16 %v134
    %v352 = vunpack.c.l.b16 %v135
    %v353 = vunpack.c.l.b16 %v136
    %v354 = vunpack.c.l.b16 %v137
    %v355 = vunpack.c.l.b16 %v138
    %v356 = vunpack.c.l.b16 %v139
    %v357 = vunpack.c.l.b16 %v140
    %v358 = vunpack.c.l.b16 %v141
    %v359 = vunpack.c.l.b16 %v142
    %v360 = vunpack.c.l.b16 %v143
    %v361 = vunpack.c.l.b16 %v144
    %v362 = vunpack.c.l.b16 %v145
    %v363 = vunpack.c.l.b16 %v146
    %v364 = vunpack.c.l.b16 %v147
    %v365 = vunpack.c.l.b16 %v148
    %v366 = vunpack.c.l.b16 %v149
    %v367 = vunpack.c.l.b16 %v150
    %v368 = vunpack.c.l.b16 %v151
    %v369 = vunpack.c.l.b16 %v152
    %v370 = vunpack.c.l.b16 %v153
    %v371 = vunpack.c.l.b16 %v154
    %v372 = vunpack.c.l.b16 %v155
    %v373 = vunpack.c.l.b16 %v156
    %v374 = vunpack.c.l.b16 %v157
    %v375 = vunpack.c.l.b16 %v158
    %v376 = vunpack.c.l.b16 %v159
    %v377 = vunpack.c.l.b16 %v160
    %v378 = vunpack.c.l.b16 %v161
    %v379 = vunpack.c.l.b16 %v162
    %v380 = vunpack.c.l.b16 %v163
    %v381 = vunpack.c.l.b16 %v164
    %v382 = vunpack.c.l.b16 %v165
    %v383 = vunpack.c.l.b16 %v166
    %v384 = vunpack.c.l.b16 %v167
    %v385 = vunpack.c.l.b16 %v168
    %v386 = vunpack.c.l.b16 %v169
    %v387 = vunpack.c.l.b16 %v170
    %v388 = vunpack.c.l.b16 %v171
    %v389 = vunpack.c.l.b16 %v172
    %v390 = vunpack.c.l.b16 %v173
    %v391 = vunpack.c.l.b16 %v174
    %v392 = vunpack.c.l.b16 %v175
    %v393 = vunpack.c.l.b16 %v176
    %v394 = vunpack.c.l.b16 %v177
    %v395 = vunpack.c.l.b16 %v178
    %v396 = vunpack.c.l.b16 %v179
    %v397 = vunpack.c.l.b16 %v180
    %v398 = vunpack.c.l.b16 %v181
    %v399 = vunpack.c.l.b16 %v182
    %v400 = vunpack.c.l.b16 %v183
    %v401 = vunpack.c.l.b16 %v184
    %v402 = vunpack.c.l.b16 %v185
    %v403 = vunpack.c.l.b16 %v186
    %v404 = vunpack.c.l.b16 %v187
    %v405 = vunpack.c.l.b16 %v188
    %v406 = vpack.c.b16 %v311, %v310
    %v407 = vpack.c.b16 %v313, %v312
    %v408 = vpack.c.b16 %v315, %v314
    %v409 = vpack.c.b16 %v317, %v316
    %v410 = vpack.c.b16 %v319, %v318
    %v411 = vpack.c.b16 %v321, %v320
    %v412 = vpack.c.b16 %v323, %v322
    %v413 = vpack.c.b16 %v325, %v324
    %v414 = vpack.c.b16 %v327, %v326
    %v415 = vpack.c.b16 %v329, %v328
    %v416 = vpack.c.b16 %v331, %v330
    %v417 = vpack.c.b16 %v333, %v332
    %v418 = vpack.c.b16 %v335, %v334
    %v419 = vpack.c.b16 %v337, %v336
    %v420 = vpack.c.b16 %v339, %v338
    %v421 = vpack.c.b16 %v341, %v340
    %v422 = vpack.c.b16 %v343, %v342
    %v423 = vpack.c.b16 %v345, %v344
    %v424 = vpack.c.b16 %v347, %v346
    %v425 = vpack.c.b16 %v349, %v348
    %v426 = vpack.c.b16 %v351, %v350
    %v427 = vpack.c.b16 %v353, %v352
    %v428 = vpack.c.b16 %v355, %v354
    %v429 = vpack.c.b16 %v357, %v356
    %v430 = vpack.c.b16 %v359, %v358
    %v431 = vpack.c.b16 %v361, %v360
    %v432 = vpack.c.b16 %v363, %v362
    %v433 = vpack.c.b16 %v365, %v364
    %v434 = vpack.c.b16 %v367, %v366
    %v435 = vpack.c.b16 %v369, %v368
    %v436 = vpack.c.b16 %v371, %v370
    %v437 = vpack.c.b16 %v373, %v372
    %v438 = vpack.c.b16 %v375, %v374
    %v439 = vpack.c.b16 %v377, %v376
    %v440 = vpack.c.b16 %v379, %v378
    %v441 = vpack.c.b16 %v381, %v380
    %v442 = vpack.c.b16 %v383, %v382
    %v443 = vpack.c.b16 %v385, %v384
    %v444 = vpack.c.b16 %v387, %v386
    %v445 = vpack.c.b16 %v389, %v388
    %v446 = vpack.c.b16 %v391, %v390
    %v447 = vpack.c.b16 %v393, %v392
    %v448 = vpack.c.b16 %v395, %v394
    %v449 = vpack.c.b16 %v397, %v396
    %v450 = vpack.c.b16 %v399, %v398
    %v451 = vpack.c.b16 %v401, %v400
    %v452 = vpack.c.b16 %v403, %v402
    %v453 = vpack.c.b16 %v405, %v404
    %502 = vmatprep.subr.bf16.mxu0 0
    %503 = vmatpush1.bf16.msra.mxu0 %v413
    %504 = vmatprep.subr.bf16.mxu0 0
    %505 = vmatpush1.bf16.msra.mxu0 %v412
    %506 = vmatprep.subr.bf16.mxu0 0
    %507 = vmatpush1.bf16.msra.mxu0 %v411
    %508 = vmatprep.subr.bf16.mxu0 0
    %509 = vmatpush1.bf16.msra.mxu0 %v410
    %510 = vmatprep.subr.bf16.mxu0 0
    %511 = vmatpush1.bf16.msra.mxu0 %v409
    %512 = vmatprep.subr.bf16.mxu0 0
    %513 = vmatpush1.bf16.msra.mxu0 %v408
    %514 = vmatprep.subr.bf16.mxu0 0
    %515 = vmatpush1.bf16.msra.mxu0 %v407
    %516 = vmatprep.subr.bf16.mxu0 0
    %517 = vmatpush1.bf16.msra.mxu0 %v406
    %518 = vmatprep.subr.bf16.mxu0 0
    %519 = vmatpush2.bf16.msra.mxu0 %v421
    %520 = vmatprep.subr.bf16.mxu0 0
    %521 = vmatpush2.bf16.msra.mxu0 %v420
    %522 = vmatprep.subr.bf16.mxu0 0
    %523 = vmatpush2.bf16.msra.mxu0 %v419
    %524 = vmatprep.subr.bf16.mxu0 0
    %525 = vmatpush2.bf16.msra.mxu0 %v418
    %526 = vmatprep.subr.bf16.mxu0 0
    %527 = vmatpush2.bf16.msra.mxu0 %v417
    %528 = vmatprep.subr.bf16.mxu0 0
    %529 = vmatpush2.bf16.msra.mxu0 %v416
    %530 = vmatprep.subr.bf16.mxu0 0
    %531 = vmatpush2.bf16.msra.mxu0 %v415
    %532 = vmatprep.subr.bf16.mxu0 0
    %533 = vmatpush2.bf16.msra.mxu0 %v414
    %534 = vmatprep.mubr.bf16.mxu0 %v203
    %535 = vmatmul.mubr.bf16.gmra.mxu0 %v202
    %v536 = vpop.f32.mrf.mxu0
    %v537 = vadd.f32 %v192, %v536
    %v538 = vpop.f32.mrf.mxu0
    %v539 = vpop.f32.mrf.mxu0
    %v540 = vpop.f32.mrf.mxu0
    %541 = vdwg.mxu0
    %542 = vmatprep.subr.bf16.mxu0 0
    %543 = vmatpush1.bf16.msra.mxu0 %v429
    %544 = vmatprep.subr.bf16.mxu0 0
    %545 = vmatpush1.bf16.msra.mxu0 %v428
    %546 = vmatprep.subr.bf16.mxu0 0
    %547 = vmatpush1.bf16.msra.mxu0 %v427
    %548 = vmatprep.subr.bf16.mxu0 0
    %549 = vmatpush1.bf16.msra.mxu0 %v426
    %550 = vmatprep.subr.bf16.mxu0 0
    %551 = vmatpush1.bf16.msra.mxu0 %v425
    %552 = vmatprep.subr.bf16.mxu0 0
    %553 = vmatpush1.bf16.msra.mxu0 %v424
    %554 = vmatprep.subr.bf16.mxu0 0
    %555 = vmatpush1.bf16.msra.mxu0 %v423
    %556 = vmatprep.subr.bf16.mxu0 0
    %557 = vmatpush1.bf16.msra.mxu0 %v422
    %558 = vmatprep.subr.bf16.mxu0 0
    %559 = vmatpush2.bf16.msra.mxu0 %v437
    %560 = vmatprep.subr.bf16.mxu0 0
    %561 = vmatpush2.bf16.msra.mxu0 %v436
    %562 = vmatprep.subr.bf16.mxu0 0
    %563 = vmatpush2.bf16.msra.mxu0 %v435
    %564 = vmatprep.subr.bf16.mxu0 0
    %565 = vmatpush2.bf16.msra.mxu0 %v434
    %566 = vmatprep.subr.bf16.mxu0 0
    %567 = vmatpush2.bf16.msra.mxu0 %v433
    %568 = vmatprep.subr.bf16.mxu0 0
    %569 = vmatpush2.bf16.msra.mxu0 %v432
    %570 = vmatprep.subr.bf16.mxu0 0
    %571 = vmatpush2.bf16.msra.mxu0 %v431
    %572 = vmatprep.subr.bf16.mxu0 0
    %573 = vmatpush2.bf16.msra.mxu0 %v430
    %574 = vmatprep.mubr.bf16.mxu0 %v205
    %575 = vmatmul.mubr.bf16.gmra.mxu0 %v204
    %v576 = vpop.f32.mrf.mxu0
    %v577 = vadd.f32 %v537, %v576
    %v578 = vpop.f32.mrf.mxu0
    %v579 = vpop.f32.mrf.mxu0
    %v580 = vpop.f32.mrf.mxu0
    %581 = vdwg.mxu0
    %582 = vmatprep.subr.bf16.mxu0 0
    %583 = vmatpush1.bf16.msra.mxu0 %v445
    %584 = vmatprep.subr.bf16.mxu0 0
    %585 = vmatpush1.bf16.msra.mxu0 %v444
    %586 = vmatprep.subr.bf16.mxu0 0
    %587 = vmatpush1.bf16.msra.mxu0 %v443
    %588 = vmatprep.subr.bf16.mxu0 0
    %589 = vmatpush1.bf16.msra.mxu0 %v442
    %590 = vmatprep.subr.bf16.mxu0 0
    %591 = vmatpush1.bf16.msra.mxu0 %v441
    %592 = vmatprep.subr.bf16.mxu0 0
    %593 = vmatpush1.bf16.msra.mxu0 %v440
    %594 = vmatprep.subr.bf16.mxu0 0
    %595 = vmatpush1.bf16.msra.mxu0 %v439
    %596 = vmatprep.subr.bf16.mxu0 0
    %597 = vmatpush1.bf16.msra.mxu0 %v438
    %598 = vmatprep.subr.bf16.mxu0 0
    %599 = vmatpush2.bf16.msra.mxu0 %v453
    %600 = vmatprep.subr.bf16.mxu0 0
    %601 = vmatpush2.bf16.msra.mxu0 %v452
    %602 = vmatprep.subr.bf16.mxu0 0
    %603 = vmatpush2.bf16.msra.mxu0 %v451
    %604 = vmatprep.subr.bf16.mxu0 0
    %605 = vmatpush2.bf16.msra.mxu0 %v450
    %606 = vmatprep.subr.bf16.mxu0 0
    %607 = vmatpush2.bf16.msra.mxu0 %v449
    %608 = vmatprep.subr.bf16.mxu0 0
    %609 = vmatpush2.bf16.msra.mxu0 %v448
    %610 = vmatprep.subr.bf16.mxu0 0
    %611 = vmatpush2.bf16.msra.mxu0 %v447
    %612 = vmatprep.subr.bf16.mxu0 0
    %613 = vmatpush2.bf16.msra.mxu0 %v446
    %614 = vmatprep.mubr.bf16.mxu0 %v207
    %615 = vmatmul.mubr.bf16.gmra.mxu0 %v206
    %v616 = vpop.f32.mrf.mxu0
    %v617 = vadd.f32 %v577, %v616
    %v618 = vpop.f32.mrf.mxu0
    %v619 = vpop.f32.mrf.mxu0
    %v620 = vpop.f32.mrf.mxu0
    %621 = vdwg.mxu0
    %v622 = vmax.f32 %v617, 0.0
    %v623 = vld [vmem:[#allocation5] sm:$0xff]
    %v624 = vld [vmem:[#allocation5 + $0x8] sm:$0xff]
    %v625 = vld [vmem:[#allocation5 + $0x10] sm:$0xff]
    %v626 = vld [vmem:[#allocation5 + $0x18] sm:$0xff]
    %v627 = vld [vmem:[#allocation8] sm:$0xf]
    %v628 = vld [vmem:[#allocation8 + $0x4] sm:$0xf]
    %v629 = vld [vmem:[#allocation8 + $0x8] sm:$0xf]
    %v630 = vld [vmem:[#allocation8 + $0xc] sm:$0xf]
    %v631 = vld [vmem:[#allocation8 + $0x10] sm:$0xf]
    %v632 = vld [vmem:[#allocation8 + $0x14] sm:$0xf]
    %v633 = vld [vmem:[#allocation8 + $0x18] sm:$0xf]
    %v634 = vld [vmem:[#allocation8 + $0x1c] sm:$0xf]
    %v635 = vld [vmem:[#allocation8 + $0x20] sm:$0xf]
    %v636 = vld [vmem:[#allocation8 + $0x24] sm:$0xf]
    %v637 = vld [vmem:[#allocation8 + $0x28] sm:$0xf]
    %v638 = vld [vmem:[#allocation8 + $0x2c] sm:$0xf]
    %v639 = vld [vmem:[#allocation8 + $0x30] sm:$0xf]
    %v640 = vld [vmem:[#allocation8 + $0x34] sm:$0xf]
    %v641 = vld [vmem:[#allocation8 + $0x38] sm:$0xf]
    %v642 = vld [vmem:[#allocation8 + $0x3c] sm:$0xf]
    %v643 = vld [vmem:[#allocation8 + $0x40] sm:$0xf]
    %v644 = vld [vmem:[#allocation8 + $0x44] sm:$0xf]
    %v645 = vld [vmem:[#allocation8 + $0x48] sm:$0xf]
    %v646 = vld [vmem:[#allocation8 + $0x4c] sm:$0xf]
    %v647 = vld [vmem:[#allocation8 + $0x50] sm:$0xf]
    %v648 = vld [vmem:[#allocation8 + $0x54] sm:$0xf]
    %v649 = vld [vmem:[#allocation8 + $0x58] sm:$0xf]
    %v650 = vld [vmem:[#allocation8 + $0x5c] sm:$0xf]
    %v651 = vld [vmem:[#allocation8 + $0x60] sm:$0xf]
    %v652 = vld [vmem:[#allocation8 + $0x64] sm:$0xf]
    %v653 = vld [vmem:[#allocation8 + $0x68] sm:$0xf]
    %v654 = vld [vmem:[#allocation8 + $0x6c] sm:$0xf]
    %v655 = vld [vmem:[#allocation8 + $0x70] sm:$0xf]
    %v656 = vld [vmem:[#allocation8 + $0x74] sm:$0xf]
    %v657 = vld [vmem:[#allocation8 + $0x78] sm:$0xf]
    %v658 = vld [vmem:[#allocation8 + $0x7c] sm:$0xf]
    %v659 = vld [vmem:[#allocation8 + $0x80] sm:$0xf]
    %v660 = vld [vmem:[#allocation8 + $0x84] sm:$0xf]
    %v661 = vld [vmem:[#allocation8 + $0x88] sm:$0xf]
    %v662 = vld [vmem:[#allocation8 + $0x8c] sm:$0xf]
    %v663 = vld [vmem:[#allocation8 + $0x90] sm:$0xf]
    %v664 = vld [vmem:[#allocation8 + $0x94] sm:$0xf]
    %v665 = vld [vmem:[#allocation8 + $0x98] sm:$0xf]
    %v666 = vld [vmem:[#allocation8 + $0x9c] sm:$0xf]
    %v667 = vld [vmem:[#allocation8 + $0xa0] sm:$0xf]
    %v668 = vld [vmem:[#allocation8 + $0xa4] sm:$0xf]
    %v669 = vld [vmem:[#allocation8 + $0xa8] sm:$0xf]
    %v670 = vld [vmem:[#allocation8 + $0xac] sm:$0xf]
    %v671 = vld [vmem:[#allocation8 + $0xb0] sm:$0xf]
    %v672 = vld [vmem:[#allocation8 + $0xb4] sm:$0xf]
    %v673 = vld [vmem:[#allocation8 + $0xb8] sm:$0xf]
    %v674 = vld [vmem:[#allocation8 + $0xbc] sm:$0xf]
    %v675 = vld [vmem:[#allocation8 + $0xc0] sm:$0xf]
    %v676 = vld [vmem:[#allocation8 + $0xc4] sm:$0xf]
    %v677 = vld [vmem:[#allocation8 + $0xc8] sm:$0xf]
    %v678 = vld [vmem:[#allocation8 + $0xcc] sm:$0xf]
    %v679 = vld [vmem:[#allocation8 + $0xd0] sm:$0xf]
    %v680 = vld [vmem:[#allocation8 + $0xd4] sm:$0xf]
    %v681 = vld [vmem:[#allocation8 + $0xd8] sm:$0xf]
    %v682 = vld [vmem:[#allocation8 + $0xdc] sm:$0xf]
    %v683 = vld [vmem:[#allocation8 + $0xe0] sm:$0xf]
    %v684 = vld [vmem:[#allocation8 + $0xe4] sm:$0xf]
    %v685 = vld [vmem:[#allocation8 + $0xe8] sm:$0xf]
    %v686 = vld [vmem:[#allocation8 + $0xec] sm:$0xf]
    %v687 = vld [vmem:[#allocation8 + $0xf0] sm:$0xf]
    %v688 = vld [vmem:[#allocation8 + $0xf4] sm:$0xf]
    %v689 = vld [vmem:[#allocation8 + $0xf8] sm:$0xf]
    %v690 = vld [vmem:[#allocation8 + $0xfc] sm:$0xf]
    %v691 = vld [vmem:[#allocation8 + $0x100] sm:$0xf]
    %v692 = vld [vmem:[#allocation8 + $0x104] sm:$0xf]
    %v693 = vld [vmem:[#allocation8 + $0x108] sm:$0xf]
    %v694 = vld [vmem:[#allocation8 + $0x10c] sm:$0xf]
    %v695 = vld [vmem:[#allocation8 + $0x110] sm:$0xf]
    %v696 = vld [vmem:[#allocation8 + $0x114] sm:$0xf]
    %v697 = vld [vmem:[#allocation8 + $0x118] sm:$0xf]
    %v698 = vld [vmem:[#allocation8 + $0x11c] sm:$0xf]
    %v699 = vld [vmem:[#allocation8 + $0x120] sm:$0xf]
    %v700 = vld [vmem:[#allocation8 + $0x124] sm:$0xf]
    %v701 = vld [vmem:[#allocation8 + $0x128] sm:$0xf]
    %v702 = vld [vmem:[#allocation8 + $0x12c] sm:$0xf]
    %v703 = vld [vmem:[#allocation8 + $0x130] sm:$0xf]
    %v704 = vld [vmem:[#allocation8 + $0x134] sm:$0xf]
    %v705 = vld [vmem:[#allocation8 + $0x138] sm:$0xf]
    %v706 = vld [vmem:[#allocation8 + $0x13c] sm:$0xf]
    %v707 = vld [vmem:[#allocation8 + $0x140] sm:$0xf]
    %v708 = vld [vmem:[#allocation8 + $0x144] sm:$0xf]
    %v709 = vld [vmem:[#allocation8 + $0x148] sm:$0xf]
    %v710 = vld [vmem:[#allocation8 + $0x14c] sm:$0xf]
    %v711 = vld [vmem:[#allocation8 + $0x150] sm:$0xf]
    %v712 = vld [vmem:[#allocation8 + $0x154] sm:$0xf]
    %v713 = vld [vmem:[#allocation8 + $0x158] sm:$0xf]
    %v714 = vld [vmem:[#allocation8 + $0x15c] sm:$0xf]
    %v715 = vld [vmem:[#allocation8 + $0x160] sm:$0xf]
    %v716 = vld [vmem:[#allocation8 + $0x164] sm:$0xf]
    %v717 = vld [vmem:[#allocation8 + $0x168] sm:$0xf]
    %v718 = vld [vmem:[#allocation8 + $0x16c] sm:$0xf]
    %v719 = vld [vmem:[#allocation8 + $0x170] sm:$0xf]
    %v720 = vld [vmem:[#allocation8 + $0x174] sm:$0xf]
    %v721 = vld [vmem:[#allocation8 + $0x178] sm:$0xf]
    %v722 = vld [vmem:[#allocation8 + $0x17c] sm:$0xf]
    %v723 = vld [vmem:[#allocation8 + $0x180] sm:$0xf]
    %v724 = vld [vmem:[#allocation8 + $0x184] sm:$0xf]
    %v725 = vld [vmem:[#allocation8 + $0x188] sm:$0xf]
    %v726 = vld [vmem:[#allocation8 + $0x18c] sm:$0xf]
    %v727 = vld [vmem:[#allocation8 + $0x190] sm:$0xf]
    %v728 = vld [vmem:[#allocation8 + $0x194] sm:$0xf]
    %v729 = vld [vmem:[#allocation8 + $0x198] sm:$0xf]
    %v730 = vld [vmem:[#allocation8 + $0x19c] sm:$0xf]
    %v731 = vld [vmem:[#allocation8 + $0x1a0] sm:$0xf]
    %v732 = vld [vmem:[#allocation8 + $0x1a4] sm:$0xf]
    %v733 = vld [vmem:[#allocation8 + $0x1a8] sm:$0xf]
    %v734 = vld [vmem:[#allocation8 + $0x1ac] sm:$0xf]
    %v735 = vld [vmem:[#allocation8 + $0x1b0] sm:$0xf]
    %v736 = vld [vmem:[#allocation8 + $0x1b4] sm:$0xf]
    %v737 = vld [vmem:[#allocation8 + $0x1b8] sm:$0xf]
    %v738 = vld [vmem:[#allocation8 + $0x1bc] sm:$0xf]
    %v739 = vld [vmem:[#allocation8 + $0x1c0] sm:$0xf]
    %v740 = vld [vmem:[#allocation8 + $0x1c4] sm:$0xf]
    %v741 = vld [vmem:[#allocation8 + $0x1c8] sm:$0xf]
    %v742 = vld [vmem:[#allocation8 + $0x1cc] sm:$0xf]
    %v743 = vld [vmem:[#allocation8 + $0x1d0] sm:$0xf]
    %v744 = vld [vmem:[#allocation8 + $0x1d4] sm:$0xf]
    %v745 = vld [vmem:[#allocation8 + $0x1d8] sm:$0xf]
    %v746 = vld [vmem:[#allocation8 + $0x1dc] sm:$0xf]
    %v747 = vld [vmem:[#allocation8 + $0x1e0] sm:$0xf]
    %v748 = vld [vmem:[#allocation8 + $0x1e4] sm:$0xf]
    %v749 = vld [vmem:[#allocation8 + $0x1e8] sm:$0xf]
    %v750 = vld [vmem:[#allocation8 + $0x1ec] sm:$0xf]
    %v751 = vld [vmem:[#allocation8 + $0x1f0] sm:$0xf]
    %v752 = vld [vmem:[#allocation8 + $0x1f4] sm:$0xf]
    %v753 = vld [vmem:[#allocation8 + $0x1f8] sm:$0xf]
    %v754 = vld [vmem:[#allocation8 + $0x1fc] sm:$0xf]
    %v759 = vunpack.c.l.b16 %v623
    %v760 = vunpack.c.h.b16 %v623
    %v761 = vunpack.c.l.b16 %v624
    %v762 = vunpack.c.h.b16 %v624
    %v763 = vunpack.c.l.b16 %v625
    %v764 = vunpack.c.h.b16 %v625
    %v765 = vunpack.c.l.b16 %v626
    %v766 = vunpack.c.h.b16 %v626
    %v767 = vpack.c.b16 %v759, %v759
    %v768 = vpack.c.b16 %v760, %v760
    %v769 = vpack.c.b16 %v761, %v761
    %v770 = vpack.c.b16 %v762, %v762
    %v771 = vpack.c.b16 %v763, %v763
    %v772 = vpack.c.b16 %v764, %v764
    %v773 = vpack.c.b16 %v765, %v765
    %v774 = vpack.c.b16 %v766, %v766
    %v911 = vunpack.c.l.b16 %v627
    %v912 = vunpack.c.l.b16 %v628
    %v913 = vunpack.c.l.b16 %v629
    %v914 = vunpack.c.l.b16 %v630
    %v915 = vunpack.c.l.b16 %v631
    %v916 = vunpack.c.l.b16 %v632
    %v917 = vunpack.c.l.b16 %v633
    %v918 = vunpack.c.l.b16 %v634
    %v919 = vunpack.c.l.b16 %v635
    %v920 = vunpack.c.l.b16 %v636
    %v921 = vunpack.c.l.b16 %v637
    %v922 = vunpack.c.l.b16 %v638
    %v923 = vunpack.c.l.b16 %v639
    %v924 = vunpack.c.l.b16 %v640
    %v925 = vunpack.c.l.b16 %v641
    %v926 = vunpack.c.l.b16 %v642
    %v927 = vunpack.c.l.b16 %v643
    %v928 = vunpack.c.l.b16 %v644
    %v929 = vunpack.c.l.b16 %v645
    %v930 = vunpack.c.l.b16 %v646
    %v931 = vunpack.c.l.b16 %v647
    %v932 = vunpack.c.l.b16 %v648
    %v933 = vunpack.c.l.b16 %v649
    %v934 = vunpack.c.l.b16 %v650
    %v935 = vunpack.c.l.b16 %v651
    %v936 = vunpack.c.l.b16 %v652
    %v937 = vunpack.c.l.b16 %v653
    %v938 = vunpack.c.l.b16 %v654
    %v939 = vunpack.c.l.b16 %v655
    %v940 = vunpack.c.l.b16 %v656
    %v941 = vunpack.c.l.b16 %v657
    %v942 = vunpack.c.l.b16 %v658
    %v943 = vunpack.c.l.b16 %v659
    %v944 = vunpack.c.l.b16 %v660
    %v945 = vunpack.c.l.b16 %v661
    %v946 = vunpack.c.l.b16 %v662
    %v947 = vunpack.c.l.b16 %v663
    %v948 = vunpack.c.l.b16 %v664
    %v949 = vunpack.c.l.b16 %v665
    %v950 = vunpack.c.l.b16 %v666
    %v951 = vunpack.c.l.b16 %v667
    %v952 = vunpack.c.l.b16 %v668
    %v953 = vunpack.c.l.b16 %v669
    %v954 = vunpack.c.l.b16 %v670
    %v955 = vunpack.c.l.b16 %v671
    %v956 = vunpack.c.l.b16 %v672
    %v957 = vunpack.c.l.b16 %v673
    %v958 = vunpack.c.l.b16 %v674
    %v959 = vunpack.c.l.b16 %v675
    %v960 = vunpack.c.l.b16 %v676
    %v961 = vunpack.c.l.b16 %v677
    %v962 = vunpack.c.l.b16 %v678
    %v963 = vunpack.c.l.b16 %v679
    %v964 = vunpack.c.l.b16 %v680
    %v965 = vunpack.c.l.b16 %v681
    %v966 = vunpack.c.l.b16 %v682
    %v967 = vunpack.c.l.b16 %v683
    %v968 = vunpack.c.l.b16 %v684
    %v969 = vunpack.c.l.b16 %v685
    %v970 = vunpack.c.l.b16 %v686
    %v971 = vunpack.c.l.b16 %v687
    %v972 = vunpack.c.l.b16 %v688
    %v973 = vunpack.c.l.b16 %v689
    %v974 = vunpack.c.l.b16 %v690
    %v975 = vunpack.c.l.b16 %v691
    %v976 = vunpack.c.l.b16 %v692
    %v977 = vunpack.c.l.b16 %v693
    %v978 = vunpack.c.l.b16 %v694
    %v979 = vunpack.c.l.b16 %v695
    %v980 = vunpack.c.l.b16 %v696
    %v981 = vunpack.c.l.b16 %v697
    %v982 = vunpack.c.l.b16 %v698
    %v983 = vunpack.c.l.b16 %v699
    %v984 = vunpack.c.l.b16 %v700
    %v985 = vunpack.c.l.b16 %v701
    %v986 = vunpack.c.l.b16 %v702
    %v987 = vunpack.c.l.b16 %v703
    %v988 = vunpack.c.l.b16 %v704
    %v989 = vunpack.c.l.b16 %v705
    %v990 = vunpack.c.l.b16 %v706
    %v991 = vunpack.c.l.b16 %v707
    %v992 = vunpack.c.l.b16 %v708
    %v993 = vunpack.c.l.b16 %v709
    %v994 = vunpack.c.l.b16 %v710
    %v995 = vunpack.c.l.b16 %v711
    %v996 = vunpack.c.l.b16 %v712
    %v997 = vunpack.c.l.b16 %v713
    %v998 = vunpack.c.l.b16 %v714
    %v999 = vunpack.c.l.b16 %v715
    %v1000 = vunpack.c.l.b16 %v716
    %v1001 = vunpack.c.l.b16 %v717
    %v1002 = vunpack.c.l.b16 %v718
    %v1003 = vunpack.c.l.b16 %v719
    %v1004 = vunpack.c.l.b16 %v720
    %v1005 = vunpack.c.l.b16 %v721
    %v1006 = vunpack.c.l.b16 %v722
    %v1007 = vunpack.c.l.b16 %v723
    %v1008 = vunpack.c.l.b16 %v724
    %v1009 = vunpack.c.l.b16 %v725
    %v1010 = vunpack.c.l.b16 %v726
    %v1011 = vunpack.c.l.b16 %v727
    %v1012 = vunpack.c.l.b16 %v728
    %v1013 = vunpack.c.l.b16 %v729
    %v1014 = vunpack.c.l.b16 %v730
    %v1015 = vunpack.c.l.b16 %v731
    %v1016 = vunpack.c.l.b16 %v732
    %v1017 = vunpack.c.l.b16 %v733
    %v1018 = vunpack.c.l.b16 %v734
    %v1019 = vunpack.c.l.b16 %v735
    %v1020 = vunpack.c.l.b16 %v736
    %v1021 = vunpack.c.l.b16 %v737
    %v1022 = vunpack.c.l.b16 %v738
    %v1023 = vunpack.c.l.b16 %v739
    %v1024 = vunpack.c.l.b16 %v740
    %v1025 = vunpack.c.l.b16 %v741
    %v1026 = vunpack.c.l.b16 %v742
    %v1027 = vunpack.c.l.b16 %v743
    %v1028 = vunpack.c.l.b16 %v744
    %v1029 = vunpack.c.l.b16 %v745
    %v1030 = vunpack.c.l.b16 %v746
    %v1031 = vunpack.c.l.b16 %v747
    %v1032 = vunpack.c.l.b16 %v748
    %v1033 = vunpack.c.l.b16 %v749
    %v1034 = vunpack.c.l.b16 %v750
    %v1035 = vunpack.c.l.b16 %v751
    %v1036 = vunpack.c.l.b16 %v752
    %v1037 = vunpack.c.l.b16 %v753
    %v1038 = vunpack.c.l.b16 %v754
    %v1039 = vpack.c.b16 %v912, %v911
    %v1040 = vpack.c.b16 %v914, %v913
    %v1041 = vpack.c.b16 %v916, %v915
    %v1042 = vpack.c.b16 %v918, %v917
    %v1043 = vpack.c.b16 %v920, %v919
    %v1044 = vpack.c.b16 %v922, %v921
    %v1045 = vpack.c.b16 %v924, %v923
    %v1046 = vpack.c.b16 %v926, %v925
    %v1047 = vpack.c.b16 %v928, %v927
    %v1048 = vpack.c.b16 %v930, %v929
    %v1049 = vpack.c.b16 %v932, %v931
    %v1050 = vpack.c.b16 %v934, %v933
    %v1051 = vpack.c.b16 %v936, %v935
    %v1052 = vpack.c.b16 %v938, %v937
    %v1053 = vpack.c.b16 %v940, %v939
    %v1054 = vpack.c.b16 %v942, %v941
    %v1055 = vpack.c.b16 %v944, %v943
    %v1056 = vpack.c.b16 %v946, %v945
    %v1057 = vpack.c.b16 %v948, %v947
    %v1058 = vpack.c.b16 %v950, %v949
    %v1059 = vpack.c.b16 %v952, %v951
    %v1060 = vpack.c.b16 %v954, %v953
    %v1061 = vpack.c.b16 %v956, %v955
    %v1062 = vpack.c.b16 %v958, %v957
    %v1063 = vpack.c.b16 %v960, %v959
    %v1064 = vpack.c.b16 %v962, %v961
    %v1065 = vpack.c.b16 %v964, %v963
    %v1066 = vpack.c.b16 %v966, %v965
    %v1067 = vpack.c.b16 %v968, %v967
    %v1068 = vpack.c.b16 %v970, %v969
    %v1069 = vpack.c.b16 %v972, %v971
    %v1070 = vpack.c.b16 %v974, %v973
    %v1071 = vpack.c.b16 %v976, %v975
    %v1072 = vpack.c.b16 %v978, %v977
    %v1073 = vpack.c.b16 %v980, %v979
    %v1074 = vpack.c.b16 %v982, %v981
    %v1075 = vpack.c.b16 %v984, %v983
    %v1076 = vpack.c.b16 %v986, %v985
    %v1077 = vpack.c.b16 %v988, %v987
    %v1078 = vpack.c.b16 %v990, %v989
    %v1079 = vpack.c.b16 %v992, %v991
    %v1080 = vpack.c.b16 %v994, %v993
    %v1081 = vpack.c.b16 %v996, %v995
    %v1082 = vpack.c.b16 %v998, %v997
    %v1083 = vpack.c.b16 %v1000, %v999
    %v1084 = vpack.c.b16 %v1002, %v1001
    %v1085 = vpack.c.b16 %v1004, %v1003
    %v1086 = vpack.c.b16 %v1006, %v1005
    %v1087 = vpack.c.b16 %v1008, %v1007
    %v1088 = vpack.c.b16 %v1010, %v1009
    %v1089 = vpack.c.b16 %v1012, %v1011
    %v1090 = vpack.c.b16 %v1014, %v1013
    %v1091 = vpack.c.b16 %v1016, %v1015
    %v1092 = vpack.c.b16 %v1018, %v1017
    %v1093 = vpack.c.b16 %v1020, %v1019
    %v1094 = vpack.c.b16 %v1022, %v1021
    %v1095 = vpack.c.b16 %v1024, %v1023
    %v1096 = vpack.c.b16 %v1026, %v1025
    %v1097 = vpack.c.b16 %v1028, %v1027
    %v1098 = vpack.c.b16 %v1030, %v1029
    %v1099 = vpack.c.b16 %v1032, %v1031
    %v1100 = vpack.c.b16 %v1034, %v1033
    %v1101 = vpack.c.b16 %v1036, %v1035
    %v1102 = vpack.c.b16 %v1038, %v1037
    %1167 = vmatprep.subr.bf16.mxu0 0
    %1168 = vmatpush1.bf16.msra.mxu0 %v1046
    %1169 = vmatprep.subr.bf16.mxu0 0
    %1170 = vmatpush1.bf16.msra.mxu0 %v1045
    %1171 = vmatprep.subr.bf16.mxu0 0
    %1172 = vmatpush1.bf16.msra.mxu0 %v1044
    %1173 = vmatprep.subr.bf16.mxu0 0
    %1174 = vmatpush1.bf16.msra.mxu0 %v1043
    %1175 = vmatprep.subr.bf16.mxu0 0
    %1176 = vmatpush1.bf16.msra.mxu0 %v1042
    %1177 = vmatprep.subr.bf16.mxu0 0
    %1178 = vmatpush1.bf16.msra.mxu0 %v1041
    %1179 = vmatprep.subr.bf16.mxu0 0
    %1180 = vmatpush1.bf16.msra.mxu0 %v1040
    %1181 = vmatprep.subr.bf16.mxu0 0
    %1182 = vmatpush1.bf16.msra.mxu0 %v1039
    %1183 = vmatprep.subr.bf16.mxu0 0
    %1184 = vmatpush2.bf16.msra.mxu0 %v1054
    %1185 = vmatprep.subr.bf16.mxu0 0
    %1186 = vmatpush2.bf16.msra.mxu0 %v1053
    %1187 = vmatprep.subr.bf16.mxu0 0
    %1188 = vmatpush2.bf16.msra.mxu0 %v1052
    %1189 = vmatprep.subr.bf16.mxu0 0
    %1190 = vmatpush2.bf16.msra.mxu0 %v1051
    %1191 = vmatprep.subr.bf16.mxu0 0
    %1192 = vmatpush2.bf16.msra.mxu0 %v1050
    %1193 = vmatprep.subr.bf16.mxu0 0
    %1194 = vmatpush2.bf16.msra.mxu0 %v1049
    %1195 = vmatprep.subr.bf16.mxu0 0
    %1196 = vmatpush2.bf16.msra.mxu0 %v1048
    %1197 = vmatprep.subr.bf16.mxu0 0
    %1198 = vmatpush2.bf16.msra.mxu0 %v1047
    %1199 = vmatprep.mubr.bf16.mxu0 %v768
    %1200 = vmatmul.mubr.bf16.gmra.mxu0 %v767
    %v1201 = vpop.f32.mrf.mxu0
    %v1202 = vadd.f32 0.0, %v1201
    %v1203 = vpop.f32.mrf.mxu0
    %v1204 = vpop.f32.mrf.mxu0
    %v1205 = vpop.f32.mrf.mxu0
    %1206 = vdwg.mxu0
    %1207 = vmatprep.subr.bf16.mxu0 0
    %1208 = vmatpush1.bf16.msra.mxu0 %v1062
    %1209 = vmatprep.subr.bf16.mxu0 0
    %1210 = vmatpush1.bf16.msra.mxu0 %v1061
    %1211 = vmatprep.subr.bf16.mxu0 0
    %1212 = vmatpush1.bf16.msra.mxu0 %v1060
    %1213 = vmatprep.subr.bf16.mxu0 0
    %1214 = vmatpush1.bf16.msra.mxu0 %v1059
    %1215 = vmatprep.subr.bf16.mxu0 0
    %1216 = vmatpush1.bf16.msra.mxu0 %v1058
    %1217 = vmatprep.subr.bf16.mxu0 0
    %1218 = vmatpush1.bf16.msra.mxu0 %v1057
    %1219 = vmatprep.subr.bf16.mxu0 0
    %1220 = vmatpush1.bf16.msra.mxu0 %v1056
    %1221 = vmatprep.subr.bf16.mxu0 0
    %1222 = vmatpush1.bf16.msra.mxu0 %v1055
    %1223 = vmatprep.subr.bf16.mxu0 0
    %1224 = vmatpush2.bf16.msra.mxu0 %v1070
    %1225 = vmatprep.subr.bf16.mxu0 0
    %1226 = vmatpush2.bf16.msra.mxu0 %v1069
    %1227 = vmatprep.subr.bf16.mxu0 0
    %1228 = vmatpush2.bf16.msra.mxu0 %v1068
    %1229 = vmatprep.subr.bf16.mxu0 0
    %1230 = vmatpush2.bf16.msra.mxu0 %v1067
    %1231 = vmatprep.subr.bf16.mxu0 0
    %1232 = vmatpush2.bf16.msra.mxu0 %v1066
    %1233 = vmatprep.subr.bf16.mxu0 0
    %1234 = vmatpush2.bf16.msra.mxu0 %v1065
    %1235 = vmatprep.subr.bf16.mxu0 0
    %1236 = vmatpush2.bf16.msra.mxu0 %v1064
    %1237 = vmatprep.subr.bf16.mxu0 0
    %1238 = vmatpush2.bf16.msra.mxu0 %v1063
    %1239 = vmatprep.mubr.bf16.mxu0 %v770
    %1240 = vmatmul.mubr.bf16.gmra.mxu0 %v769
    %v1241 = vpop.f32.mrf.mxu0
    %v1242 = vadd.f32 %v1202, %v1241
    %v1243 = vpop.f32.mrf.mxu0
    %v1244 = vpop.f32.mrf.mxu0
    %v1245 = vpop.f32.mrf.mxu0
    %1246 = vdwg.mxu0
    %1247 = vmatprep.subr.bf16.mxu0 0
    %1248 = vmatpush1.bf16.msra.mxu0 %v1078
    %1249 = vmatprep.subr.bf16.mxu0 0
    %1250 = vmatpush1.bf16.msra.mxu0 %v1077
    %1251 = vmatprep.subr.bf16.mxu0 0
    %1252 = vmatpush1.bf16.msra.mxu0 %v1076
    %1253 = vmatprep.subr.bf16.mxu0 0
    %1254 = vmatpush1.bf16.msra.mxu0 %v1075
    %1255 = vmatprep.subr.bf16.mxu0 0
    %1256 = vmatpush1.bf16.msra.mxu0 %v1074
    %1257 = vmatprep.subr.bf16.mxu0 0
    %1258 = vmatpush1.bf16.msra.mxu0 %v1073
    %1259 = vmatprep.subr.bf16.mxu0 0
    %1260 = vmatpush1.bf16.msra.mxu0 %v1072
    %1261 = vmatprep.subr.bf16.mxu0 0
    %1262 = vmatpush1.bf16.msra.mxu0 %v1071
    %1263 = vmatprep.subr.bf16.mxu0 0
    %1264 = vmatpush2.bf16.msra.mxu0 %v1086
    %1265 = vmatprep.subr.bf16.mxu0 0
    %1266 = vmatpush2.bf16.msra.mxu0 %v1085
    %1267 = vmatprep.subr.bf16.mxu0 0
    %1268 = vmatpush2.bf16.msra.mxu0 %v1084
    %1269 = vmatprep.subr.bf16.mxu0 0
    %1270 = vmatpush2.bf16.msra.mxu0 %v1083
    %1271 = vmatprep.subr.bf16.mxu0 0
    %1272 = vmatpush2.bf16.msra.mxu0 %v1082
    %1273 = vmatprep.subr.bf16.mxu0 0
    %1274 = vmatpush2.bf16.msra.mxu0 %v1081
    %1275 = vmatprep.subr.bf16.mxu0 0
    %1276 = vmatpush2.bf16.msra.mxu0 %v1080
    %1277 = vmatprep.subr.bf16.mxu0 0
    %1278 = vmatpush2.bf16.msra.mxu0 %v1079
    %1279 = vmatprep.mubr.bf16.mxu0 %v772
    %1280 = vmatmul.mubr.bf16.gmra.mxu0 %v771
    %v1281 = vpop.f32.mrf.mxu0
    %v1282 = vadd.f32 %v1242, %v1281
    %v1283 = vpop.f32.mrf.mxu0
    %v1284 = vpop.f32.mrf.mxu0
    %v1285 = vpop.f32.mrf.mxu0
    %1286 = vdwg.mxu0
    %1287 = vmatprep.subr.bf16.mxu0 0
    %1288 = vmatpush1.bf16.msra.mxu0 %v1094
    %1289 = vmatprep.subr.bf16.mxu0 0
    %1290 = vmatpush1.bf16.msra.mxu0 %v1093
    %1291 = vmatprep.subr.bf16.mxu0 0
    %1292 = vmatpush1.bf16.msra.mxu0 %v1092
    %1293 = vmatprep.subr.bf16.mxu0 0
    %1294 = vmatpush1.bf16.msra.mxu0 %v1091
    %1295 = vmatprep.subr.bf16.mxu0 0
    %1296 = vmatpush1.bf16.msra.mxu0 %v1090
    %1297 = vmatprep.subr.bf16.mxu0 0
    %1298 = vmatpush1.bf16.msra.mxu0 %v1089
    %1299 = vmatprep.subr.bf16.mxu0 0
    %1300 = vmatpush1.bf16.msra.mxu0 %v1088
    %1301 = vmatprep.subr.bf16.mxu0 0
    %1302 = vmatpush1.bf16.msra.mxu0 %v1087
    %1303 = vmatprep.subr.bf16.mxu0 0
    %1304 = vmatpush2.bf16.msra.mxu0 %v1102
    %1305 = vmatprep.subr.bf16.mxu0 0
    %1306 = vmatpush2.bf16.msra.mxu0 %v1101
    %1307 = vmatprep.subr.bf16.mxu0 0
    %1308 = vmatpush2.bf16.msra.mxu0 %v1100
    %1309 = vmatprep.subr.bf16.mxu0 0
    %1310 = vmatpush2.bf16.msra.mxu0 %v1099
    %1311 = vmatprep.subr.bf16.mxu0 0
    %1312 = vmatpush2.bf16.msra.mxu0 %v1098
    %1313 = vmatprep.subr.bf16.mxu0 0
    %1314 = vmatpush2.bf16.msra.mxu0 %v1097
    %1315 = vmatprep.subr.bf16.mxu0 0
    %1316 = vmatpush2.bf16.msra.mxu0 %v1096
    %1317 = vmatprep.subr.bf16.mxu0 0
    %1318 = vmatpush2.bf16.msra.mxu0 %v1095
    %1319 = vmatprep.mubr.bf16.mxu0 %v774
    %1320 = vmatmul.mubr.bf16.gmra.mxu0 %v773
    %v1321 = vpop.f32.mrf.mxu0
    %v1322 = vadd.f32 %v1282, %v1321
    %v1323 = vpop.f32.mrf.mxu0
    %v1324 = vpop.f32.mrf.mxu0
    %v1325 = vpop.f32.mrf.mxu0
    %1326 = vdwg.mxu0
    %v1327 = vmax.f32 %v1322, 0.0
    %v1328 = vpack.c.bf16 %v622, %v622
    %v1329 = vpack.c.bf16 %v1327, %v1327
    %v1330 = vld [vmem:[#allocation10] sm:$0xf]
    %v1331 = vld [vmem:[#allocation10 + $0x4] sm:$0xf]
    %v1332 = vld [vmem:[#allocation10 + $0x8] sm:$0xf]
    %v1333 = vld [vmem:[#allocation10 + $0xc] sm:$0xf]
    %v1334 = vld [vmem:[#allocation10 + $0x10] sm:$0xf]
    %v1335 = vld [vmem:[#allocation10 + $0x14] sm:$0xf]
    %v1336 = vld [vmem:[#allocation10 + $0x18] sm:$0xf]
    %v1337 = vld [vmem:[#allocation10 + $0x1c] sm:$0xf]
    %v1338 = vld [vmem:[#allocation10 + $0x20] sm:$0xf]
    %v1339 = vld [vmem:[#allocation10 + $0x24] sm:$0xf]
    %v1340 = vld [vmem:[#allocation10 + $0x28] sm:$0xf]
    %v1341 = vld [vmem:[#allocation10 + $0x2c] sm:$0xf]
    %v1342 = vld [vmem:[#allocation10 + $0x30] sm:$0xf]
    %v1343 = vld [vmem:[#allocation10 + $0x34] sm:$0xf]
    %v1344 = vld [vmem:[#allocation10 + $0x38] sm:$0xf]
    %v1345 = vld [vmem:[#allocation10 + $0x3c] sm:$0xf]
    %v1346 = vld [vmem:[#allocation10 + $0x40] sm:$0xf]
    %v1347 = vld [vmem:[#allocation10 + $0x44] sm:$0xf]
    %v1348 = vld [vmem:[#allocation10 + $0x48] sm:$0xf]
    %v1349 = vld [vmem:[#allocation10 + $0x4c] sm:$0xf]
    %v1350 = vld [vmem:[#allocation10 + $0x50] sm:$0xf]
    %v1351 = vld [vmem:[#allocation10 + $0x54] sm:$0xf]
    %v1352 = vld [vmem:[#allocation10 + $0x58] sm:$0xf]
    %v1353 = vld [vmem:[#allocation10 + $0x5c] sm:$0xf]
    %v1354 = vld [vmem:[#allocation10 + $0x60] sm:$0xf]
    %v1355 = vld [vmem:[#allocation10 + $0x64] sm:$0xf]
    %v1356 = vld [vmem:[#allocation10 + $0x68] sm:$0xf]
    %v1357 = vld [vmem:[#allocation10 + $0x6c] sm:$0xf]
    %v1358 = vld [vmem:[#allocation10 + $0x70] sm:$0xf]
    %v1359 = vld [vmem:[#allocation10 + $0x74] sm:$0xf]
    %v1360 = vld [vmem:[#allocation10 + $0x78] sm:$0xf]
    %v1361 = vld [vmem:[#allocation10 + $0x7c] sm:$0xf]
    %v1362 = vlaneseq
    %v1363 = vshrl.u32 %v1362, 7
    %v1364 = vsub.s32 1, %v1363
    %v1365 = vrot.slane %v89, %v1364
    %v1398 = vunpack.c.l.b16 %v1330
    %v1399 = vunpack.c.l.b16 %v1331
    %v1400 = vunpack.c.l.b16 %v1332
    %v1401 = vunpack.c.l.b16 %v1333
    %v1402 = vunpack.c.l.b16 %v1334
    %v1403 = vunpack.c.l.b16 %v1335
    %v1404 = vunpack.c.l.b16 %v1336
    %v1405 = vunpack.c.l.b16 %v1337
    %v1406 = vunpack.c.l.b16 %v1338
    %v1407 = vunpack.c.l.b16 %v1339
    %v1408 = vunpack.c.l.b16 %v1340
    %v1409 = vunpack.c.l.b16 %v1341
    %v1410 = vunpack.c.l.b16 %v1342
    %v1411 = vunpack.c.l.b16 %v1343
    %v1412 = vunpack.c.l.b16 %v1344
    %v1413 = vunpack.c.l.b16 %v1345
    %v1414 = vunpack.c.l.b16 %v1346
    %v1415 = vunpack.c.l.b16 %v1347
    %v1416 = vunpack.c.l.b16 %v1348
    %v1417 = vunpack.c.l.b16 %v1349
    %v1418 = vunpack.c.l.b16 %v1350
    %v1419 = vunpack.c.l.b16 %v1351
    %v1420 = vunpack.c.l.b16 %v1352
    %v1421 = vunpack.c.l.b16 %v1353
    %v1422 = vunpack.c.l.b16 %v1354
    %v1423 = vunpack.c.l.b16 %v1355
    %v1424 = vunpack.c.l.b16 %v1356
    %v1425 = vunpack.c.l.b16 %v1357
    %v1426 = vunpack.c.l.b16 %v1358
    %v1427 = vunpack.c.l.b16 %v1359
    %v1428 = vunpack.c.l.b16 %v1360
    %v1429 = vunpack.c.l.b16 %v1361
    %v1430 = vpack.c.b16 %v1399, %v1398
    %v1431 = vpack.c.b16 %v1401, %v1400
    %v1432 = vpack.c.b16 %v1403, %v1402
    %v1433 = vpack.c.b16 %v1405, %v1404
    %v1434 = vpack.c.b16 %v1407, %v1406
    %v1435 = vpack.c.b16 %v1409, %v1408
    %v1436 = vpack.c.b16 %v1411, %v1410
    %v1437 = vpack.c.b16 %v1413, %v1412
    %v1438 = vpack.c.b16 %v1415, %v1414
    %v1439 = vpack.c.b16 %v1417, %v1416
    %v1440 = vpack.c.b16 %v1419, %v1418
    %v1441 = vpack.c.b16 %v1421, %v1420
    %v1442 = vpack.c.b16 %v1423, %v1422
    %v1443 = vpack.c.b16 %v1425, %v1424
    %v1444 = vpack.c.b16 %v1427, %v1426
    %v1445 = vpack.c.b16 %v1429, %v1428
    %1462 = vmatprep.subr.bf16.mxu0 0
    %1463 = vmatpush1.bf16.msra.mxu0 %v1437
    %1464 = vmatprep.subr.bf16.mxu0 0
    %1465 = vmatpush1.bf16.msra.mxu0 %v1436
    %1466 = vmatprep.subr.bf16.mxu0 0
    %1467 = vmatpush1.bf16.msra.mxu0 %v1435
    %1468 = vmatprep.subr.bf16.mxu0 0
    %1469 = vmatpush1.bf16.msra.mxu0 %v1434
    %1470 = vmatprep.subr.bf16.mxu0 0
    %1471 = vmatpush1.bf16.msra.mxu0 %v1433
    %1472 = vmatprep.subr.bf16.mxu0 0
    %1473 = vmatpush1.bf16.msra.mxu0 %v1432
    %1474 = vmatprep.subr.bf16.mxu0 0
    %1475 = vmatpush1.bf16.msra.mxu0 %v1431
    %1476 = vmatprep.subr.bf16.mxu0 0
    %1477 = vmatpush1.bf16.msra.mxu0 %v1430
    %1478 = vmatprep.subr.bf16.mxu0 0
    %1479 = vmatpush2.bf16.msra.mxu0 %v1445
    %1480 = vmatprep.subr.bf16.mxu0 0
    %1481 = vmatpush2.bf16.msra.mxu0 %v1444
    %1482 = vmatprep.subr.bf16.mxu0 0
    %1483 = vmatpush2.bf16.msra.mxu0 %v1443
    %1484 = vmatprep.subr.bf16.mxu0 0
    %1485 = vmatpush2.bf16.msra.mxu0 %v1442
    %1486 = vmatprep.subr.bf16.mxu0 0
    %1487 = vmatpush2.bf16.msra.mxu0 %v1441
    %1488 = vmatprep.subr.bf16.mxu0 0
    %1489 = vmatpush2.bf16.msra.mxu0 %v1440
    %1490 = vmatprep.subr.bf16.mxu0 0
    %1491 = vmatpush2.bf16.msra.mxu0 %v1439
    %1492 = vmatprep.subr.bf16.mxu0 0
    %1493 = vmatpush2.bf16.msra.mxu0 %v1438
    %1494 = vmatprep.mubr.bf16.mxu0 %v1329
    %1495 = vmatmul.mubr.bf16.gmra.mxu0 %v1328
    %v1496 = vpop.f32.mrf.mxu0
    %v1497 = vadd.f32 %v1365, %v1496
    %v1498 = vpop.f32.mrf.mxu0
    %v1499 = vpop.f32.mrf.mxu0
    %v1500 = vpop.f32.mrf.mxu0
    %1501 = vdwg.mxu0
    %1502 = vst [vmem:[#allocation11] sm:$0xff] %v1497
    // Predicated region
    $region46: #{tpu_custom_call.1} parent=1 // pred_check
      _
    $region47: #{tpu_custom_call.1} parent=1 // pred_check_branch
      %1504 = sbr.rel (0) target = $region49
    $region48: #{tpu_custom_call.1} parent=1 // pred_region
      %s1506 = ssub.s32 128, 128
      %1507 = vsyncadd [#allocation4], %s1506
      %s1509 = sshll.u32 [#allocation11], 4
      %s1510 = int_to_ptr.vmem [resolvable:$true] %s1509
      %1512 = dma.vmem_to_hbm [thread:$0]  %s1510, 128, %s6, [#allocation4]
    $region49: #{tpu_custom_call.1} parent=1 // pred_fallthru
      _
    // Predicated region
    $region50: #{tpu_custom_call.1} parent=1 // pred_check
      _
    $region51: #{tpu_custom_call.1} parent=1 // pred_check_branch
      %1514 = sbr.rel (0) target = $region53
    $region52: #{tpu_custom_call.1} parent=1 // pred_region
      %1515 = dma.done [#allocation4], 128
    $region53: #{tpu_custom_call.1} parent=1 // pred_fallthru
      _
    %1516 = vsyncpa [#allocation3], 1
    %1517 = vsyncpa [#allocation6], 1
    %1518 = vsyncpa [#allocation9], 1
    %1519 = vsyncpa [#allocation4], 1

</llo_original>
